<compile_context>
chip_gen: v6e
topology: v6e:2x2x1
jax: 0.10.0
libtpu: 0.0.40
codegen_flags: <defaults>
</compile_context>

<pallas_src>
import functools

import jax
import jax.numpy as jnp
from jax.experimental import pallas as pl
from jax.experimental.pallas import tpu as pltpu


def _cdiv(a, b):
    return -(-a // b)


def _round_up(a, b):
    return _cdiv(a, b) * b


def _round_down(a, b):
    return (a // b) * b


def _sublane_tile(dtype):
    # Native sublane packing of a (8,128) vreg tile: 8 f32 / 16 bf16 / 32 int8.
    itemsize = jnp.dtype(dtype).itemsize
    return 8 * max(1, 4 // itemsize)


# ------------------------------ kernel body --------------------------------


def _fusion_kernel(weighted, ws_ref, x_ref, *rest):
    """rest = (a_0_ref, ..., a_{n-2}_ref, o_ref); refs are (rows_i, T_HW) tiles.

    Channel-count differences are handled with *static* row-range splits over
    the output channels: each range is accumulated from every input that
    covers it and stored exactly once.  Only static ref slices are used (no
    value pad/concat, no output read-modify-write).  In the common
    equal-channel case there is a single range == one full-tile store.
    """
    a_refs = rest[:-1]
    o_ref = rest[-1]
    cx = o_ref.shape[0]

    # Split points: every fused input whose (block) row count is < cx ends a
    # range; cx closes the last range.  All static Python ints.
    bounds = sorted({min(a_ref.shape[0], cx) for a_ref in a_refs} | {cx})

    lo = 0
    for hi in bounds:
        x = x_ref[lo:hi, :]
        if weighted:
            # ws is an f32 scalar in SMEM; cast the scalar so bf16 tiles stay
            # in bf16 (documented drift vs PyTorch's f32 promotion).
            x = x * ws_ref[0].astype(x.dtype)
        acc = x
        for i, a_ref in enumerate(a_refs):
            if a_ref.shape[0] >= hi:          # this input covers rows [lo, hi)
                a = a_ref[lo:hi, :]
                if weighted:
                    a = a * ws_ref[i + 1].astype(a.dtype)
                acc = acc + a
        # Lane-dense store; written exactly once per row range (masked only on
        # a ragged spatial tail tile / sublane-unaligned range boundary).
        o_ref[lo:hi, :] = acc.astype(o_ref.dtype)
        lo = hi


# ------------------------------ wrapper -------------------------------------


def weighted_feature_fusion(x, fused, w=None, weight=False, vmem_budget_bytes=None):
    """x: (N, Cx, H, W); fused: list of (N, Ci, H, W) = [outputs[l] for l in layers]."""
    n = len(fused) + 1
    N, Cx, H, W = x.shape
    HW = H * W
    dtype = x.dtype
    itemsize = jnp.dtype(dtype).itemsize
    sub = _sublane_tile(dtype)

    # ---- per-generation VMEM budget (bounds the double-buffered footprint) --
    vmem_limit_bytes = None
    if vmem_budget_bytes is None:
        try:
            kind = jax.devices()[0].device_kind.lower()
        except Exception:  # pragma: no cover - defensive
            kind = ""
        if "v5" in kind:
            vmem_budget_bytes = 10 * 1024 * 1024     # 16 MiB default scoped limit
        elif "v6" in kind:
            vmem_budget_bytes = 24 * 1024 * 1024     # 128 MiB physical; raise limit
            vmem_limit_bytes = 64 * 1024 * 1024
        elif "v7" in kind or "7x" in kind:
            vmem_budget_bytes = 20 * 1024 * 1024     # 64 MiB physical / 32 MiB default
        else:
            vmem_budget_bytes = 12 * 1024 * 1024

    # ---- weights: f32 scalars, scalar-prefetched into SMEM ------------------
    if weight:
        ws = (jax.nn.sigmoid(w.astype(jnp.float32)) * (2.0 / n)).astype(jnp.float32)
    else:
        ws = jnp.zeros((n,), jnp.float32)            # never read in-kernel

    kernel = functools.partial(_fusion_kernel, bool(weight))
    fused_c = [a.shape[1] for a in fused]
    equal_c = all(ca == Cx for ca in fused_c)

    if equal_c:
        # ---- equal-channel fast path: (N*Cx, HW), dense 2-D blocks ----------
        NC = N * Cx
        x2 = x.reshape(NC, HW)
        a2 = [a.reshape(NC, HW) for a in fused]

        n_bufs = n + 1                                # inputs + output
        elems = max(1, vmem_budget_bytes // (2 * n_bufs * itemsize))
        hw_lanes = _round_up(HW, 128)

        rows_full_hw = elems // hw_lanes
        if rows_full_hw >= min(NC, sub):
            t_hw = HW                                 # full-extent lane dim
            t_r = NC if NC <= rows_full_hw else max(sub, _round_down(rows_full_hw, sub))
        else:
            t_r = NC if NC < sub else sub
            lanes = elems // _round_up(t_r, sub)
            t_hw = min(_round_up(HW, 128), max(128, _round_down(lanes, 128)))
            if t_hw >= HW:
                t_hw = HW
        num_r = _cdiv(NC, t_r)
        num_hw = _cdiv(HW, t_hw)

        # Megacore guard: keep >= 2 grid points so v7x's 2nd TC isn't idle.
        if num_r * num_hw == 1:
            if HW >= 256:
                t_hw = _round_up(_cdiv(HW, 2), 128)
                num_hw = _cdiv(HW, t_hw)
            elif NC >= 2 * sub:
                t_r = _round_up(_cdiv(NC, 2), sub)
                num_r = _cdiv(NC, t_r)

        spec = pl.BlockSpec((t_r, t_hw), lambda r, s, ws_r: (r, s))
        in_specs = [spec] * n
        out_spec = spec
        grid = (num_r, num_hw)
        out_shape = jax.ShapeDtypeStruct((NC, HW), dtype)
        call_inputs = (x2, *a2)
        bytes_read = sum(int(a.size) * itemsize for a in call_inputs) + int(ws.size) * 4
    else:
        # ---- general path: (N, Ci, HW), per-input channel blocks ------------
        x2 = x.reshape(N, Cx, HW)
        a2 = [a.reshape(N, ca, HW) for a, ca in zip(fused, fused_c)]

        # Block channel count per fused input:
        #   ca <= Cx -> full ca rows (partial add handled by in-kernel ranges)
        #   ca >  Cx -> only the first min(ca, round_up(Cx, sublane)) rows are
        #               DMA'd (always tiling-legal; the rest is never read).
        blk_c = [min(ca, _round_up(Cx, sub)) if ca > Cx else ca for ca in fused_c]

        rows = 2 * _round_up(Cx, sub) + sum(_round_up(c, sub) for c in blk_c)
        lanes_budget = max(128, vmem_budget_bytes // (2 * rows * itemsize))
        if lanes_budget >= _round_up(HW, 128):
            t_hw = HW                                 # single full-extent tile
        else:
            t_hw = max(128, _round_down(lanes_budget, 128))
        num_hw = _cdiv(HW, t_hw)

        # Megacore guard (only the spatial axis can be split here).
        if N * num_hw == 1 and HW >= 256:
            t_hw = _round_up(_cdiv(HW, 2), 128)
            num_hw = _cdiv(HW, t_hw)

        def _spec(c):
            return pl.BlockSpec((pl.Squeezed(), c, t_hw),
                                lambda b, s, ws_r: (b, 0, s))

        in_specs = [_spec(Cx)] + [_spec(c) for c in blk_c]
        out_spec = _spec(Cx)
        grid = (N, num_hw)
        out_shape = jax.ShapeDtypeStruct((N, Cx, HW), dtype)
        call_inputs = (x2, *a2)
        bytes_read = (int(x2.size) * itemsize
                      + sum(N * c * HW * itemsize for c in blk_c)
                      + int(ws.size) * 4)

    bytes_out = N * Cx * HW * itemsize
    flops = N * Cx * HW * ((n - 1) + (n if weight else 0))
    cost = pl.CostEstimate(flops=int(flops), transcendentals=0,
                           bytes_accessed=int(bytes_read + bytes_out))

    out = pl.pallas_call(
        kernel,
        out_shape=out_shape,
        grid_spec=pltpu.PrefetchScalarGridSpec(
            num_scalar_prefetch=1,
            grid=grid,
            in_specs=in_specs,
            out_specs=out_spec,
        ),
        # x is call-arg index 1 (right after the single scalar-prefetch arg
        # `ws`); it aliases the output so the fusion overwrites x's HBM buffer
        # in place -- no second N*Cx*HW buffer.
        input_output_aliases={1: 0},
        cost_estimate=cost,
        compiler_params=pltpu.CompilerParams(
            # Both axes write disjoint output blocks -> megacore sharding.
            dimension_semantics=("parallel", "parallel"),
            vmem_limit_bytes=vmem_limit_bytes,
        ),
    )(ws, *call_inputs)

    return out.reshape(N, Cx, H, W)


# ------------------------------ reference -----------------------------------


def _reference(x, outputs, layers, w=None, weight=False):
    """Pure-JAX reference matching the PyTorch forward."""
    n = len(layers) + 1
    if weight:
        ws = jax.nn.sigmoid(w) * (2.0 / n)
        x = x * ws[0]
    nx = x.shape[1]
    for i in range(n - 1):
        a = outputs[layers[i]] * ws[i + 1] if weight else outputs[layers[i]]
        na = a.shape[1]
        if nx == na:
            x = x + a
        elif nx > na:
            x = x.at[:, :na].add(a)
        else:
            x = x + a[:, :nx]
    return x


if __name__ == "__main__":
    key = jax.random.PRNGKey(0)
    k0, k1, k2, k3, k4, k5, k6, k7 = jax.random.split(key, 8)

    # --- tests 1 & 2: mixed channel counts, 16x16 (HW = 256) -----------------
    N, Cx, H, W = 2, 4, 16, 16
    x = jax.random.normal(k0, (N, Cx, H, W), jnp.float32)
    outputs = [
        jax.random.normal(k1, (N, 4, H, W), jnp.float32),   # same channels
        jax.random.normal(k2, (N, 2, H, W), jnp.float32),   # fewer (nx > na)
        jax.random.normal(k3, (N, 8, H, W), jnp.float32),   # more  (nx < na)
    ]
    layers = [0, 1, 2]
    n = len(layers) + 1
    w_param = jnp.arange(n, dtype=jnp.float32) * 0.1 - 0.15
    fused = [outputs[l] for l in layers]

    out = jax.block_until_ready(
        weighted_feature_fusion(x, fused, w=w_param, weight=True))
    ref = _reference(x, outputs, layers, w=w_param, weight=True)
    assert out.shape == ref.shape and out.dtype == ref.dtype
    assert jnp.allclose(out, ref, atol=1e-5, rtol=1e-5), "mismatch (weighted)"

    out_nw = jax.block_until_ready(weighted_feature_fusion(x, fused, weight=False))
    ref_nw = _reference(x, outputs, layers, weight=False)
    assert jnp.allclose(out_nw, ref_nw, atol=1e-5, rtol=1e-5), "mismatch (no weight)"

    # --- test 3: non-128-multiple spatial (10x10), no wrapper pad ------------
    H2 = W2 = 10
    x3 = jax.random.normal(k4, (N, Cx, H2, W2), jnp.float32)
    fused3 = [
        jax.random.normal(k1, (N, 4, H2, W2), jnp.float32),
        jax.random.normal(k2, (N, 2, H2, W2), jnp.float32),
    ]
    w3 = jnp.array([0.2, -0.1, 0.3], jnp.float32)
    out3 = jax.block_until_ready(
        weighted_feature_fusion(x3, fused3, w=w3, weight=True))
    ref3 = _reference(x3, fused3, [0, 1], w=w3, weight=True)
    assert jnp.allclose(out3, ref3, atol=1e-5, rtol=1e-5), "mismatch (odd HW)"

    # --- test 4: equal-channel fast path, 13x13 -------------------------------
    C4 = 8
    x4 = jax.random.normal(k5, (N, C4, 13, 13), jnp.float32)
    fused4 = [jax.random.normal(k6, (N, C4, 13, 13), jnp.float32),
              jax.random.normal(k7, (N, C4, 13, 13), jnp.float32)]
    w4 = jnp.array([0.05, -0.2, 0.15], jnp.float32)
    out4 = jax.block_until_ready(
        weighted_feature_fusion(x4, fused4, w=w4, weight=True))
    ref4 = _reference(x4, fused4, [0, 1], w=w4, weight=True)
    assert jnp.allclose(out4, ref4, atol=1e-5, rtol=1e-5), "mismatch (fast path)"

    # --- test 5: forced multi-tile spatial grid with a masked tail tile ------
    x5 = jax.random.normal(k0, (1, 8, 20, 20), jnp.float32)
    fused5 = [jax.random.normal(k1, (1, 8, 20, 20), jnp.float32),
              jax.random.normal(k2, (1, 4, 20, 20), jnp.float32)]
    w5 = jnp.array([0.3, 0.1, -0.05], jnp.float32)
    out5 = jax.block_until_ready(
        weighted_feature_fusion(x5, fused5, w=w5, weight=True,
                                vmem_budget_bytes=64 * 1024))
    ref5 = _reference(x5, fused5, [0, 1], w=w5, weight=True)
    assert jnp.allclose(out5, ref5, atol=1e-5, rtol=1e-5), "mismatch (masked tail)"

    print("KERNEL_OK")
</pallas_src>

<mosaic_0001>
module attributes {stable_mosaic.version = 11 : i64} {
  func.func @_fusion_kernel(%arg0: i32, %arg1: i32, %arg2: memref<4xf32, #tpu.memory_space<smem>>, %arg3: memref<1x4x256xf32, #tpu.memory_space<vmem>>, %arg4: memref<1x4x256xf32, #tpu.memory_space<vmem>>, %arg5: memref<1x2x256xf32, #tpu.memory_space<vmem>>, %arg6: memref<1x8x256xf32, #tpu.memory_space<vmem>>, %arg7: memref<1x4x256xf32, #tpu.memory_space<vmem>>) attributes {dimension_semantics = [#tpu.dimension_semantics<parallel>, #tpu.dimension_semantics<parallel>], iteration_bounds = array<i64: 2, 1>, scalar_prefetch = 1 : i64, scratch_operands = 0 : i64, tpu.core_type = #tpu.core_type<tc>, window_params = [{transform_indices = @transform_0, window_bounds = array<i64: 1, 4, 256>}, {transform_indices = @transform_1, window_bounds = array<i64: 1, 4, 256>}, {transform_indices = @transform_2, window_bounds = array<i64: 1, 2, 256>}, {transform_indices = @transform_3, window_bounds = array<i64: 1, 8, 256>}, {transform_indices = @transform_4, window_bounds = array<i64: 1, 4, 256>}]} {
    %c0 = arith.constant 0 : index
    %c0_0 = arith.constant 0 : index
    %c0_1 = arith.constant 0 : index
    %0 = vector.load %arg3[%c0, %c0_0, %c0_1] : memref<1x4x256xf32, #tpu.memory_space<vmem>>, vector<1x2x256xf32>
    %1 = vector.shape_cast %0 : vector<1x2x256xf32> to vector<2x256xf32>
    %c0_2 = arith.constant 0 : index
    %2 = memref.load %arg2[%c0_2] : memref<4xf32, #tpu.memory_space<smem>>
    %3 = vector.broadcast %2 : f32 to vector<2x256xf32>
    %4 = arith.mulf %1, %3 : vector<2x256xf32>
    %c0_3 = arith.constant 0 : index
    %c0_4 = arith.constant 0 : index
    %c0_5 = arith.constant 0 : index
    %5 = vector.load %arg4[%c0_3, %c0_4, %c0_5] : memref<1x4x256xf32, #tpu.memory_space<vmem>>, vector<1x2x256xf32>
    %6 = vector.shape_cast %5 : vector<1x2x256xf32> to vector<2x256xf32>
    %c1 = arith.constant 1 : index
    %7 = memref.load %arg2[%c1] : memref<4xf32, #tpu.memory_space<smem>>
    %8 = vector.broadcast %7 : f32 to vector<2x256xf32>
    %9 = arith.mulf %6, %8 : vector<2x256xf32>
    %10 = arith.addf %4, %9 : vector<2x256xf32>
    %c0_6 = arith.constant 0 : index
    %c0_7 = arith.constant 0 : index
    %c0_8 = arith.constant 0 : index
    %11 = vector.load %arg5[%c0_6, %c0_7, %c0_8] : memref<1x2x256xf32, #tpu.memory_space<vmem>>, vector<1x2x256xf32>
    %12 = vector.shape_cast %11 : vector<1x2x256xf32> to vector<2x256xf32>
    %c2 = arith.constant 2 : index
    %13 = memref.load %arg2[%c2] : memref<4xf32, #tpu.memory_space<smem>>
    %14 = vector.broadcast %13 : f32 to vector<2x256xf32>
    %15 = arith.mulf %12, %14 : vector<2x256xf32>
    %16 = arith.addf %10, %15 : vector<2x256xf32>
    %c0_9 = arith.constant 0 : index
    %c0_10 = arith.constant 0 : index
    %c0_11 = arith.constant 0 : index
    %17 = vector.load %arg6[%c0_9, %c0_10, %c0_11] : memref<1x8x256xf32, #tpu.memory_space<vmem>>, vector<1x2x256xf32>
    %18 = vector.shape_cast %17 : vector<1x2x256xf32> to vector<2x256xf32>
    %c3 = arith.constant 3 : index
    %19 = memref.load %arg2[%c3] : memref<4xf32, #tpu.memory_space<smem>>
    %20 = vector.broadcast %19 : f32 to vector<2x256xf32>
    %21 = arith.mulf %18, %20 : vector<2x256xf32>
    %22 = arith.addf %16, %21 : vector<2x256xf32>
    %c0_12 = arith.constant 0 : index
    %c0_13 = arith.constant 0 : index
    %c0_14 = arith.constant 0 : index
    %23 = vector.load %arg7[%c0_12, %c0_13, %c0_14] : memref<1x4x256xf32, #tpu.memory_space<vmem>>, vector<1x2x256xf32>
    %24 = vector.shape_cast %23 : vector<1x2x256xf32> to vector<2x256xf32>
    %25 = vector.shape_cast %22 : vector<2x256xf32> to vector<1x2x256xf32>
    tpu.vector_store %arg7[%c0_12, %c0_13, %c0_14], %25 {strides = array<i32>} : memref<1x4x256xf32, #tpu.memory_space<vmem>>, vector<1x2x256xf32>,
    %c0_15 = arith.constant 0 : index
    %c2_16 = arith.constant 2 : index
    %c0_17 = arith.constant 0 : index
    %26 = vector.load %arg3[%c0_15, %c2_16, %c0_17] : memref<1x4x256xf32, #tpu.memory_space<vmem>>, vector<1x2x256xf32>
    %27 = vector.shape_cast %26 : vector<1x2x256xf32> to vector<2x256xf32>
    %c0_18 = arith.constant 0 : index
    %28 = memref.load %arg2[%c0_18] : memref<4xf32, #tpu.memory_space<smem>>
    %29 = vector.broadcast %28 : f32 to vector<2x256xf32>
    %30 = arith.mulf %27, %29 : vector<2x256xf32>
    %c0_19 = arith.constant 0 : index
    %c2_20 = arith.constant 2 : index
    %c0_21 = arith.constant 0 : index
    %31 = vector.load %arg4[%c0_19, %c2_20, %c0_21] : memref<1x4x256xf32, #tpu.memory_space<vmem>>, vector<1x2x256xf32>
    %32 = vector.shape_cast %31 : vector<1x2x256xf32> to vector<2x256xf32>
    %c1_22 = arith.constant 1 : index
    %33 = memref.load %arg2[%c1_22] : memref<4xf32, #tpu.memory_space<smem>>
    %34 = vector.broadcast %33 : f32 to vector<2x256xf32>
    %35 = arith.mulf %32, %34 : vector<2x256xf32>
    %36 = arith.addf %30, %35 : vector<2x256xf32>
    %c0_23 = arith.constant 0 : index
    %c2_24 = arith.constant 2 : index
    %c0_25 = arith.constant 0 : index
    %37 = vector.load %arg6[%c0_23, %c2_24, %c0_25] : memref<1x8x256xf32, #tpu.memory_space<vmem>>, vector<1x2x256xf32>
    %38 = vector.shape_cast %37 : vector<1x2x256xf32> to vector<2x256xf32>
    %c3_26 = arith.constant 3 : index
    %39 = memref.load %arg2[%c3_26] : memref<4xf32, #tpu.memory_space<smem>>
    %40 = vector.broadcast %39 : f32 to vector<2x256xf32>
    %41 = arith.mulf %38, %40 : vector<2x256xf32>
    %42 = arith.addf %36, %41 : vector<2x256xf32>
    %c0_27 = arith.constant 0 : index
    %c2_28 = arith.constant 2 : index
    %c0_29 = arith.constant 0 : index
    %43 = vector.load %arg7[%c0_27, %c2_28, %c0_29] : memref<1x4x256xf32, #tpu.memory_space<vmem>>, vector<1x2x256xf32>
    %44 = vector.shape_cast %43 : vector<1x2x256xf32> to vector<2x256xf32>
    %45 = vector.shape_cast %42 : vector<2x256xf32> to vector<1x2x256xf32>
    tpu.vector_store %arg7[%c0_27, %c2_28, %c0_29], %45 {strides = array<i32>} : memref<1x4x256xf32, #tpu.memory_space<vmem>>, vector<1x2x256xf32>,
    return
  }
  func.func @transform_0(%arg0: i32, %arg1: i32, %arg2: memref<4xf32, #tpu.memory_space<smem>>) -> (i32, i32, i32) {
    %c0_i32 = arith.constant 0 : i32
    %c0_i32_0 = arith.constant 0 : i32
    return %arg0, %c0_i32, %arg1 : i32, i32, i32
  }
  func.func @transform_1(%arg0: i32, %arg1: i32, %arg2: memref<4xf32, #tpu.memory_space<smem>>) -> (i32, i32, i32) {
    %c0_i32 = arith.constant 0 : i32
    %c0_i32_0 = arith.constant 0 : i32
    return %arg0, %c0_i32, %arg1 : i32, i32, i32
  }
  func.func @transform_2(%arg0: i32, %arg1: i32, %arg2: memref<4xf32, #tpu.memory_space<smem>>) -> (i32, i32, i32) {
    %c0_i32 = arith.constant 0 : i32
    %c0_i32_0 = arith.constant 0 : i32
    return %arg0, %c0_i32, %arg1 : i32, i32, i32
  }
  func.func @transform_3(%arg0: i32, %arg1: i32, %arg2: memref<4xf32, #tpu.memory_space<smem>>) -> (i32, i32, i32) {
    %c0_i32 = arith.constant 0 : i32
    %c0_i32_0 = arith.constant 0 : i32
    return %arg0, %c0_i32, %arg1 : i32, i32, i32
  }
  func.func @transform_4(%arg0: i32, %arg1: i32, %arg2: memref<4xf32, #tpu.memory_space<smem>>) -> (i32, i32, i32) {
    %c0_i32 = arith.constant 0 : i32
    %c0_i32_0 = arith.constant 0 : i32
    return %arg0, %c0_i32, %arg1 : i32, i32, i32
  }
}

</mosaic_0001>

<llo_original>
// kernel: tpu_custom_call.1
$region0: #{tpu_custom_call.1}
  #allocation0 [shape = 'u32[]', space=smem, size = 0x4, offset = 0x4, fixed_abs, tag = 'smem constant byte address 0x4 - core index']
  #allocation1 [shape = 'u32[144,128]{1,0:T(1,128)}', space=vmem, size = 0x12000, scoped, tag = 'internal scratch']
  #allocation2 [shape = 's32[1]{0}', space=sflag, size = 0x4, scoped, tag = 'scoped memory for tpu_custom_call.1']
  #allocation3 [shape = 'u8[512]{0}', space=smem, size = 0x200, scoped, tag = 'prefetched SMEM operand 0']
  %s0 = inlined_call_operand.vmem [shape: f32[4], index: 0, kind: input, shape index: {}]
  %s1 = inlined_call_operand.hbm [shape: f32[2,4,256], index: 1, kind: input, shape index: {}, may-alias: {1,5}]
  %s2 = inlined_call_operand.hbm [shape: f32[2,4,256], index: 2, kind: input, shape index: {}]
  %s3 = inlined_call_operand.hbm [shape: f32[2,2,256], index: 3, kind: input, shape index: {}]
  %s4 = inlined_call_operand.vmem [shape: f32[2,8,256], index: 4, kind: input, shape index: {}]
  %s5 = inlined_call_operand.hbm [shape: f32[2,4,256], index: 5, kind: output, shape index: {}, may-alias: {1,5}]
  %s6 = sld [smem:[#allocation0]]
  $region61: #{tpu_custom_call.1} parent=0
    _
  %s8 = ssub.s32 1, %s6
  %s9 = scalar_select 0, %s8, %s6
  %s10 = sshll.u32 %s0, 4
  %s11 = int_to_ptr.vmem [resolvable:$true] %s10
  %13 = dma.vmem_to_smem %s11, 16, [#allocation3], [#allocation2]
  %14 = dma.done [#allocation2], 16
  %15 = sfence
  $region1: #{tpu_custom_call.1} parent=0
    #allocation4 [shape = 'u8[8192]{0}', space=vmem, size = 0x2000, scoped, tag = 'input window, operand 1']
    #allocation5 [shape = 's32[2]{0}', space=sflag, size = 0x8, scoped, tag = 'scoped memory for tpu_custom_call.1']
    #allocation6 [shape = 's32[2]{0}', space=sflag, size = 0x8, scoped, tag = 'scoped memory for tpu_custom_call.1']
    #allocation7 [shape = 'u8[8192]{0}', space=vmem, size = 0x2000, scoped, tag = 'input window, operand 2']
    #allocation8 [shape = 's32[2]{0}', space=sflag, size = 0x8, scoped, tag = 'scoped memory for tpu_custom_call.1']
    #allocation9 [shape = 'u8[4096]{0}', space=vmem, size = 0x1000, scoped, tag = 'input window, operand 3']
    #allocation10 [shape = 'u8[8192]{0}', space=vmem, size = 0x2000, scoped, tag = 'output window, operand 0']
    %16 = vsyncpa [#allocation5], 0
    %s17 = scalar_lea.sflag [#allocation5], 1
    %18 = vsyncpa %s17, 0
    %19 = vsyncpa [#allocation8], 0
    %s20 = scalar_lea.sflag [#allocation8], 1
    %21 = vsyncpa %s20, 0
    %22 = vsyncpa [#allocation6], 0
    %s23 = scalar_lea.sflag [#allocation6], 1
    %24 = vsyncpa %s23, 0
    loop: start=0, step=1, limit=4
    $region2: #{tpu_custom_call.1} parent=1 // loop_pre_header
      _
    $region3: #{tpu_custom_call.1} parent=1 // loop_header
      %s26 = sphi 0, %s30
      %p27 = scmp.ge.s32.totalorder %s26, 4
      %s33 = sphi 0, %s45
      %s34 = sphi 0, %s41
      %s35 = sphi 0, %s33
      %s36 = sphi 0, %s34
      %s37 = sphi 0, %s35
      %s38 = sphi 0, %s36
      %s50 = sphi 0, %s52
      %s53 = sphi 0, %s50
      %s54 = sphi 0, %s53
      %s70 = sphi 0, %s54
      %s78 = sphi 0, %s80
      %s81 = sphi 0, %s78
      %s82 = sphi 0, %s81
      %s98 = sphi 0, %s82
      %s106 = sphi 0, %s108
      %s109 = sphi 0, %s106
      %s110 = sphi 0, %s109
      %s126 = sphi 0, %s110
      %s134 = sphi 0, %s136
      %s137 = sphi 0, %s134
      %s138 = sphi 0, %s137
      %s154 = sphi 0, %s138
      %s162 = sphi 0, %s164
      %s165 = sphi 0, %s162
      %s166 = sphi 0, %s165
      %s182 = sphi 0, %s166
    $region4: #{tpu_custom_call.1} parent=1 // loop_header_branch
      %29 = sbr.rel (%p27) target = $region8
    $region5: #{tpu_custom_call.1} parent=1 // loop_body
      %s31 = ssub.s32 %s26, 1
      %s32 = ssub.s32 %s26, 2
      %s39 = sadd.s32 1, %s34
      %p40 = scmp.ge.s32.totalorder %s39, 1
      %s41 = scalar_select %p40, 0, %s39
      %s42 = sadd.s32 1, %s33
      %s43 = scalar_select %p40, %s42, %s33
      %p44 = scmp.ge.s32.totalorder %s43, 2
      %s45 = scalar_select %p44, 0, %s43
      %s46 = ssub.s32 %s33, %s45
      %s47 = ssub.s32 %s34, %s41
      %s48 = sor.u32 %s46, %s47
      %p49 = scmp.eq.s32.totalorder %s48, 0
      %s51 = sadd.s32 %s50, 1
      %s52 = scalar_select %p49, %s50, %s51
      %p55 = pneg %p49
      %p56 = scmp.eq.s32.totalorder %s26, 1
      %p57 = por %p55, %p56
      %p58 = scmp.ne.s32.totalorder %s50, %s53
      %p59 = scmp.eq.s32.totalorder %s26, 0
      %p60 = por %p58, %p59
      %p61 = scmp.ne.s32.totalorder %s50, %s53
      %p62 = scmp.eq.s32.totalorder %s31, 1
      %p63 = por %p61, %p62
      %p64 = scmp.ne.s32.totalorder %s53, %s54
      %p65 = scmp.eq.s32.totalorder %s31, 0
      %p66 = por %p64, %p65
      %p67 = scmp.ne.s32.totalorder %s53, %s54
      %p68 = scmp.eq.s32.totalorder %s32, 1
      %p69 = por %p67, %p68
      %p71 = scmp.ne.s32.totalorder %s54, %s70
      %p72 = scmp.eq.s32.totalorder %s32, 0
      %p73 = por %p71, %p72
      %s74 = ssub.s32 %s33, %s45
      %s75 = ssub.s32 %s34, %s41
      %s76 = sor.u32 %s74, %s75
      %p77 = scmp.eq.s32.totalorder %s76, 0
      %s79 = sadd.s32 %s78, 1
      %s80 = scalar_select %p77, %s78, %s79
      %p83 = pneg %p77
      %p84 = scmp.eq.s32.totalorder %s26, 1
      %p85 = por %p83, %p84
      %p86 = scmp.ne.s32.totalorder %s78, %s81
      %p87 = scmp.eq.s32.totalorder %s26, 0
      %p88 = por %p86, %p87
      %p89 = scmp.ne.s32.totalorder %s78, %s81
      %p90 = scmp.eq.s32.totalorder %s31, 1
      %p91 = por %p89, %p90
      %p92 = scmp.ne.s32.totalorder %s81, %s82
      %p93 = scmp.eq.s32.totalorder %s31, 0
      %p94 = por %p92, %p93
      %p95 = scmp.ne.s32.totalorder %s81, %s82
      %p96 = scmp.eq.s32.totalorder %s32, 1
      %p97 = por %p95, %p96
      %p99 = scmp.ne.s32.totalorder %s82, %s98
      %p100 = scmp.eq.s32.totalorder %s32, 0
      %p101 = por %p99, %p100
      %s102 = ssub.s32 %s33, %s45
      %s103 = ssub.s32 %s34, %s41
      %s104 = sor.u32 %s102, %s103
      %p105 = scmp.eq.s32.totalorder %s104, 0
      %s107 = sadd.s32 %s106, 1
      %s108 = scalar_select %p105, %s106, %s107
      %p111 = pneg %p105
      %p112 = scmp.eq.s32.totalorder %s26, 1
      %p113 = por %p111, %p112
      %p114 = scmp.ne.s32.totalorder %s106, %s109
      %p115 = scmp.eq.s32.totalorder %s26, 0
      %p116 = por %p114, %p115
      %p117 = scmp.ne.s32.totalorder %s106, %s109
      %p118 = scmp.eq.s32.totalorder %s31, 1
      %p119 = por %p117, %p118
      %p120 = scmp.ne.s32.totalorder %s109, %s110
      %p121 = scmp.eq.s32.totalorder %s31, 0
      %p122 = por %p120, %p121
      %p123 = scmp.ne.s32.totalorder %s109, %s110
      %p124 = scmp.eq.s32.totalorder %s32, 1
      %p125 = por %p123, %p124
      %p127 = scmp.ne.s32.totalorder %s110, %s126
      %p128 = scmp.eq.s32.totalorder %s32, 0
      %p129 = por %p127, %p128
      %s130 = ssub.s32 %s33, %s45
      %s131 = ssub.s32 %s34, %s41
      %s132 = sor.u32 %s130, %s131
      %p133 = scmp.eq.s32.totalorder %s132, 0
      %s135 = sadd.s32 %s134, 1
      %s136 = scalar_select %p133, %s134, %s135
      %p139 = pneg %p133
      %p140 = scmp.eq.s32.totalorder %s26, 1
      %p141 = por %p139, %p140
      %p142 = scmp.ne.s32.totalorder %s134, %s137
      %p143 = scmp.eq.s32.totalorder %s26, 0
      %p144 = por %p142, %p143
      %p145 = scmp.ne.s32.totalorder %s134, %s137
      %p146 = scmp.eq.s32.totalorder %s31, 1
      %p147 = por %p145, %p146
      %p148 = scmp.ne.s32.totalorder %s137, %s138
      %p149 = scmp.eq.s32.totalorder %s31, 0
      %p150 = por %p148, %p149
      %p151 = scmp.ne.s32.totalorder %s137, %s138
      %p152 = scmp.eq.s32.totalorder %s32, 1
      %p153 = por %p151, %p152
      %p155 = scmp.ne.s32.totalorder %s138, %s154
      %p156 = scmp.eq.s32.totalorder %s32, 0
      %p157 = por %p155, %p156
      %s158 = ssub.s32 %s33, %s45
      %s159 = ssub.s32 %s34, %s41
      %s160 = sor.u32 %s158, %s159
      %p161 = scmp.eq.s32.totalorder %s160, 0
      %s163 = sadd.s32 %s162, 1
      %s164 = scalar_select %p161, %s162, %s163
      %p167 = pneg %p161
      %p168 = scmp.eq.s32.totalorder %s26, 1
      %p169 = por %p167, %p168
      %p170 = scmp.ne.s32.totalorder %s162, %s165
      %p171 = scmp.eq.s32.totalorder %s26, 0
      %p172 = por %p170, %p171
      %p173 = scmp.ne.s32.totalorder %s162, %s165
      %p174 = scmp.eq.s32.totalorder %s31, 1
      %p175 = por %p173, %p174
      %p176 = scmp.ne.s32.totalorder %s165, %s166
      %p177 = scmp.eq.s32.totalorder %s31, 0
      %p178 = por %p176, %p177
      %p179 = scmp.ne.s32.totalorder %s165, %s166
      %p180 = scmp.eq.s32.totalorder %s32, 1
      %p181 = por %p179, %p180
      %p183 = scmp.ne.s32.totalorder %s166, %s182
      %p184 = scmp.eq.s32.totalorder %s32, 0
      %p185 = por %p183, %p184
      %p186 = scmp.le.s32.totalorder 1, %s26
      %p187 = scmp.lt.s32.totalorder %s26, 3
      %p188 = pnand %p186, %p187
      %p189 = pneg %p188
      // Predicated region
      $region9: #{tpu_custom_call.1} parent=5 // pred_check
        _
      $region10: #{tpu_custom_call.1} parent=5 // pred_check_branch
        %191 = sbr.rel (%p188) target = $region12
      $region11: #{tpu_custom_call.1} parent=5 // pred_region
        %s192 = ssub.s32 %s26, 1
      $region12: #{tpu_custom_call.1} parent=5 // pred_fallthru
        _
      %p193 = scmp.lt.s32.totalorder %s26, 2
      // Predicated region
      $region13: #{tpu_custom_call.1} parent=5 // pred_check
        %p194 = pneg %p193
      $region14: #{tpu_custom_call.1} parent=5 // pred_check_branch
        %196 = sbr.rel (%p194) target = $region16
      $region15: #{tpu_custom_call.1} parent=5 // pred_region
        // Predicated region
        $region17: #{tpu_custom_call.1} parent=15 // pred_check
          %p197 = pneg %p60
        $region18: #{tpu_custom_call.1} parent=15 // pred_check_branch
          %199 = sbr.rel (%p197) target = $region20
        $region19: #{tpu_custom_call.1} parent=15 // pred_region
          %s200 = sand.u32 %s50, 1
          %s201 = scalar_lea.sflag [#allocation5], %s200
          %s202 = sand.u32 %s50, 1
          %s203 = smul.addr %s202, 8
          %s204 = scalar_lea.vmem [#allocation4], %s203
          %s205 = smul.u32 2, %s34
          %s207 = ssub.s32 128, 128
          %208 = vsyncadd %s201, %s207
          %s209 = smul.addr %s33, 2
          %s210 = sadd.s32 %s205, %s209
          %s211 = smul.addr %s210, 64
          %s212 = scalar_lea.hbm %s1, %s211
          %s214 = sshll.u32 %s204, 4
          %s215 = int_to_ptr.vmem [resolvable:$true] %s214
          %217 = dma.hbm_to_vmem [thread:$0]  %s212, 128, %s215, %s201
        $region20: #{tpu_custom_call.1} parent=15 // pred_fallthru
          _
        // Predicated region
        $region21: #{tpu_custom_call.1} parent=15 // pred_check
          %p218 = pneg %p88
        $region22: #{tpu_custom_call.1} parent=15 // pred_check_branch
          %220 = sbr.rel (%p218) target = $region24
        $region23: #{tpu_custom_call.1} parent=15 // pred_region
          %s221 = sand.u32 %s26, 1
          %s222 = scalar_lea.sflag [#allocation8], %s221
          %s223 = sand.u32 %s78, 1
          %s224 = smul.addr %s223, 8
          %s225 = scalar_lea.vmem [#allocation7], %s224
          %s226 = smul.u32 2, %s34
          %s228 = ssub.s32 128, 128
          %229 = vsyncadd %s222, %s228
          %s230 = smul.addr %s33, 2
          %s231 = sadd.s32 %s226, %s230
          %s232 = smul.addr %s231, 64
          %s233 = scalar_lea.hbm %s2, %s232
          %s235 = sshll.u32 %s225, 4
          %s236 = int_to_ptr.vmem [resolvable:$true] %s235
          %238 = dma.hbm_to_vmem [thread:$0]  %s233, 128, %s236, %s222
        $region24: #{tpu_custom_call.1} parent=15 // pred_fallthru
          _
        // Predicated region
        $region25: #{tpu_custom_call.1} parent=15 // pred_check
          %p239 = pneg %p116
        $region26: #{tpu_custom_call.1} parent=15 // pred_check_branch
          %241 = sbr.rel (%p239) target = $region28
        $region27: #{tpu_custom_call.1} parent=15 // pred_region
          %s242 = sand.u32 %s26, 1
          %s243 = scalar_lea.sflag [#allocation8], %s242
          %s244 = sand.u32 %s106, 1
          %s245 = smul.addr %s244, 4
          %s246 = scalar_lea.vmem [#allocation9], %s245
          %s247 = smul.u32 2, %s34
          %s249 = ssub.s32 64, 64
          %250 = vsyncadd %s243, %s249
          %s251 = smul.addr %s33, 2
          %s252 = sadd.s32 %s247, %s251
          %s253 = smul.addr %s252, 32
          %s254 = scalar_lea.hbm %s3, %s253
          %s256 = sshll.u32 %s246, 4
          %s257 = int_to_ptr.vmem [resolvable:$true] %s256
          %259 = dma.hbm_to_vmem [thread:$0]  %s254, 64, %s257, %s243
        $region28: #{tpu_custom_call.1} parent=15 // pred_fallthru
          _
        // Predicated region
        $region29: #{tpu_custom_call.1} parent=15 // pred_check
          %p260 = pneg %p144
        $region30: #{tpu_custom_call.1} parent=15 // pred_check_branch
          %262 = sbr.rel (%p260) target = $region32
        $region31: #{tpu_custom_call.1} parent=15 // pred_region
          %s263 = smul.u32 2, %s34
          %p264 = scmp.lt.s32.totalorder %s33, 1
          %s265 = scalar_select %p264, %s33, 1
          %p266 = scmp.lt.s32.totalorder %s263, 1
          %s267 = scalar_select %p266, %s263, 1
          %s268 = smul.addr %s265, 2
          %s269 = sadd.s32 %s267, %s268
          %s270 = smul.addr %s269, 8
          %s271 = scalar_lea.vmem %s4, %s270
          %s272 = smul.u32 2, %s34
        $region32: #{tpu_custom_call.1} parent=15 // pred_fallthru
          _
      $region16: #{tpu_custom_call.1} parent=5 // pred_fallthru
        _
      %p273 = scmp.le.s32.totalorder 1, %s26
      %p274 = scmp.lt.s32.totalorder %s26, 3
      %p275 = pnand %p273, %p274
      %p276 = pneg %p275
      // Predicated region
      $region33: #{tpu_custom_call.1} parent=5 // pred_check
        _
      $region34: #{tpu_custom_call.1} parent=5 // pred_check_branch
        %278 = sbr.rel (%p275) target = $region36
      $region35: #{tpu_custom_call.1} parent=5 // pred_region
        %s279 = ssub.s32 %s26, 1
        %s280 = sand.u32 %s53, 1
        %s281 = scalar_lea.sflag [#allocation5], %s280
        %s282 = sand.u32 %s53, 1
        %s283 = smul.addr %s282, 8
        %s284 = scalar_lea.vmem [#allocation4], %s283
        // Predicated region
        $region37: #{tpu_custom_call.1} parent=35 // pred_check
          %p285 = pneg %p66
        $region38: #{tpu_custom_call.1} parent=35 // pred_check_branch
          %287 = sbr.rel (%p285) target = $region40
        $region39: #{tpu_custom_call.1} parent=35 // pred_region
          %288 = dma.done %s281, 128
        $region40: #{tpu_custom_call.1} parent=35 // pred_fallthru
          _
        %s289 = sand.u32 %s31, 1
        %s290 = scalar_lea.sflag [#allocation8], %s289
        %s291 = sand.u32 %s81, 1
        %s292 = smul.addr %s291, 8
        %s293 = scalar_lea.vmem [#allocation7], %s292
        // Predicated region
        $region41: #{tpu_custom_call.1} parent=35 // pred_check
          %p294 = pneg %p94
        $region42: #{tpu_custom_call.1} parent=35 // pred_check_branch
          %296 = sbr.rel (%p294) target = $region44
        $region43: #{tpu_custom_call.1} parent=35 // pred_region
          %297 = dma.done %s290, 128
        $region44: #{tpu_custom_call.1} parent=35 // pred_fallthru
          _
        %s298 = sand.u32 %s31, 1
        %s299 = scalar_lea.sflag [#allocation8], %s298
        %s300 = sand.u32 %s109, 1
        %s301 = smul.addr %s300, 4
        %s302 = scalar_lea.vmem [#allocation9], %s301
        // Predicated region
        $region45: #{tpu_custom_call.1} parent=35 // pred_check
          %p303 = pneg %p122
        $region46: #{tpu_custom_call.1} parent=35 // pred_check_branch
          %305 = sbr.rel (%p303) target = $region48
        $region47: #{tpu_custom_call.1} parent=35 // pred_region
          %306 = dma.done %s299, 64
        $region48: #{tpu_custom_call.1} parent=35 // pred_fallthru
          _
        %s307 = sand.u32 %s53, 1
        %s308 = scalar_lea.sflag [#allocation5], %s307
        %s309 = sand.u32 %s53, 1
        %s310 = smul.addr %s309, 8
        %s311 = scalar_lea.vmem [#allocation4], %s310
        %p312 = pneg %p66
        %p313 = pneg %p63
        %s314 = sand.u32 %s31, 1
        %s315 = scalar_lea.sflag [#allocation8], %s314
        %s316 = sand.u32 %s81, 1
        %s317 = smul.addr %s316, 8
        %s318 = scalar_lea.vmem [#allocation7], %s317
        %p319 = pneg %p94
        %p320 = pneg %p91
        %s321 = sand.u32 %s31, 1
        %s322 = scalar_lea.sflag [#allocation8], %s321
        %s323 = sand.u32 %s109, 1
        %s324 = smul.addr %s323, 4
        %s325 = scalar_lea.vmem [#allocation9], %s324
        %p326 = pneg %p122
        %p327 = pneg %p119
        %s328 = smul.u32 2, %s36
        %p329 = scmp.lt.s32.totalorder %s35, 1
        %s330 = scalar_select %p329, %s35, 1
        %p331 = scmp.lt.s32.totalorder %s328, 1
        %s332 = scalar_select %p331, %s328, 1
        %s333 = smul.addr %s330, 2
        %s334 = sadd.s32 %s332, %s333
        %s335 = smul.addr %s334, 8
        %s336 = scalar_lea.vmem %s4, %s335
        %p337 = pneg %p150
        %p338 = pneg %p147
        %p339 = pneg %p178
        %p340 = pneg %p175
        %s341 = sand.u32 %s165, 1
        %s342 = scalar_lea.sflag [#allocation6], %s341
        %s343 = sand.u32 %s165, 1
        %s344 = smul.addr %s343, 8
        %s345 = scalar_lea.vmem [#allocation10], %s344
        %s346 = smul.u32 2, %s36
        %s347 = smul.u32 2, %s36
        %s348 = smul.u32 2, %s36
        %s349 = smul.u32 2, %s36
        %p350 = scmp.lt.s32.totalorder %s35, 1
        %s351 = scalar_select %p350, %s35, 1
        %p352 = scmp.lt.s32.totalorder %s349, 1
        %s353 = scalar_select %p352, %s349, 1
        %s354 = smul.addr %s351, 2
        %s355 = sadd.s32 %s353, %s354
        %s356 = smul.addr %s355, 8
        %s357 = scalar_lea.vmem %s4, %s356
        %s358 = smul.u32 2, %s36
        %s359 = smul.u32 2, %s36
        %v360 = vld [vmem:[%s284] sm:$0x33]
        %s361 = sld [smem:[#allocation3]]
        %v362 = vstv %s361
        %v363 = vmul.f32 %v360, %v362
        %v364 = vld [vmem:[%s293] sm:$0x33]
        %s365 = sld [smem:[#allocation3 + $0x1]]
        %v366 = vstv %s365
        %v367 = vmul.f32 %v364, %v366
        %v368 = vadd.f32 %v363, %v367
        %v369 = vld [vmem:[%s302] sm:$0xf]
        %s370 = sld [smem:[#allocation3 + $0x2]]
        %v371 = vstv %s370
        %v372 = vmul.f32 %v369, %v371
        %v375 = vunpack.c.l.s4 1983009808
        %v376 = vunpack.c.0.s8 %v375
        %v377 = vlaneseq
        %v378 = vshrl.u32 %v377, 7
        %v379 = vsub.s32 %v376, %v378
        %v380 = vrot.slane %v372, %v379
        %v382 = vadd.f32 %v368, %v380
        %v383 = vld [vmem:[%s357] sm:$0x3]
        %v384 = vld [vmem:[%s357 + $0x8] sm:$0x3]
        %s385 = sld [smem:[#allocation3 + $0x3]]
        %v386 = vstv %s385
        %v387 = vmul.f32 %v383, %v386
        %v388 = vmul.f32 %v384, %v386
        %v391 = vcombine.low %v387, %v388
        %v393 = vadd.f32 %v382, %v391
        %394 = vst [vmem:[%s345] sm:$0x33] %v393
        %v395 = vld [vmem:[%s284] sm:$0xcc]
        %s396 = sld [smem:[#allocation3]]
        %v397 = vstv %s396
        %v398 = vmul.f32 %v395, %v397
        %v399 = vld [vmem:[%s293] sm:$0xcc]
        %s400 = sld [smem:[#allocation3 + $0x1]]
        %v401 = vstv %s400
        %v402 = vmul.f32 %v399, %v401
        %v403 = vadd.f32 %v398, %v402
        %v404 = vld [vmem:[%s357] sm:$0xc]
        %v405 = vld [vmem:[%s357 + $0x8] sm:$0xc]
        %s406 = sld [smem:[#allocation3 + $0x3]]
        %v407 = vstv %s406
        %v408 = vmul.f32 %v404, %v407
        %v409 = vmul.f32 %v405, %v407
        %v412 = vcombine.low %v408, %v409
        %v414 = vadd.f32 %v403, %v412
        %415 = vst [vmem:[%s345] sm:$0xcc] %v414
        %s416 = sand.u32 %s165, 1
        %s417 = scalar_lea.sflag [#allocation6], %s416
        %s418 = sand.u32 %s165, 1
        %s419 = smul.addr %s418, 8
        %s420 = scalar_lea.vmem [#allocation10], %s419
        // Predicated region
        $region49: #{tpu_custom_call.1} parent=35 // pred_check
          %p421 = pneg %p175
        $region50: #{tpu_custom_call.1} parent=35 // pred_check_branch
          %423 = sbr.rel (%p421) target = $region52
        $region51: #{tpu_custom_call.1} parent=35 // pred_region
          %s424 = smul.u32 2, %s36
          %s426 = ssub.s32 128, 128
          %427 = vsyncadd %s417, %s426
          %s428 = smul.addr %s35, 2
          %s429 = sadd.s32 %s424, %s428
          %s430 = smul.addr %s429, 64
          %s431 = scalar_lea.hbm %s5, %s430
          %s433 = sshll.u32 %s420, 4
          %s434 = int_to_ptr.vmem [resolvable:$true] %s433
          %436 = dma.vmem_to_hbm [thread:$0]  %s434, 128, %s431, %s417
        $region52: #{tpu_custom_call.1} parent=35 // pred_fallthru
          _
      $region36: #{tpu_custom_call.1} parent=5 // pred_fallthru
        _
      %p437 = scmp.le.s32.totalorder 2, %s26
      // Predicated region
      $region53: #{tpu_custom_call.1} parent=5 // pred_check
        %p438 = pneg %p437
      $region54: #{tpu_custom_call.1} parent=5 // pred_check_branch
        %440 = sbr.rel (%p438) target = $region56
      $region55: #{tpu_custom_call.1} parent=5 // pred_region
        %s441 = ssub.s32 %s26, 2
        // Predicated region
        $region57: #{tpu_custom_call.1} parent=55 // pred_check
          %p442 = pneg %p181
        $region58: #{tpu_custom_call.1} parent=55 // pred_check_branch
          %444 = sbr.rel (%p442) target = $region60
        $region59: #{tpu_custom_call.1} parent=55 // pred_region
          %s445 = sand.u32 %s166, 1
          %s446 = scalar_lea.sflag [#allocation6], %s445
          %s447 = sand.u32 %s166, 1
          %s448 = smul.addr %s447, 8
          %s449 = scalar_lea.vmem [#allocation10], %s448
          %450 = dma.done %s446, 128
        $region60: #{tpu_custom_call.1} parent=55 // pred_fallthru
          _
      $region56: #{tpu_custom_call.1} parent=5 // pred_fallthru
        _
    $region6: #{tpu_custom_call.1} parent=1 // loop_footer
      %s30 = sadd.s32 1, %s26
    $region7: #{tpu_custom_call.1} parent=1 // loop_footer_branch
      %25 = sbr.rel target = $region3
    $region8: #{tpu_custom_call.1} parent=1 // loop_exit
      _
    %451 = vsyncpa [#allocation5], 1
    %s452 = scalar_lea.sflag [#allocation5], 1
    %453 = vsyncpa %s452, 1
    %454 = vsyncpa [#allocation8], 1
    %s455 = scalar_lea.sflag [#allocation8], 1
    %456 = vsyncpa %s455, 1
    %457 = vsyncpa [#allocation6], 1
    %s458 = scalar_lea.sflag [#allocation6], 1
    %459 = vsyncpa %s458, 1

</llo_original>
